<compile_context>
chip_gen: v5e
topology: v5e:2x2
jax: 0.10.0
libtpu: 0.0.40
codegen_flags: <defaults>
</compile_context>

<pallas_src>
import functools

import jax
import jax.numpy as jnp
from jax.experimental import pallas as pl
from jax.experimental.pallas import tpu as pltpu


def _round_up(x, m):
    return (x + m - 1) // m * m


def _cdiv(a, b):
    return -(-a // b)


def _pool_linear_kernel(x_ref, w_ref, b_ref, o_ref, *, inv_pool):
    """One batch tile.

    x_ref : (P, TB, F) f32   pooling-tap slabs (P = kh*kw)
    w_ref : (F, O_pad) bf16/f32   original Linear weight, [in, out] layout
    b_ref : (1, O_pad) f32
    o_ref : (TB, O_pad) f32
    """
    # Average pool on the VPU: sum the kh*kw taps (leading, non-tiled axis)
    # then scale.  Accumulation stays f32; cast to the weight dtype only for
    # the MXU operands (preferred_element_type keeps the matmul accum in f32).
    feat = jnp.sum(x_ref[...], axis=0) * inv_pool          # (TB, F) f32
    feat = feat.astype(w_ref.dtype)
    o_ref[...] = (
        jnp.dot(feat, w_ref[...], preferred_element_type=jnp.float32)
        + b_ref[...]
    )


@functools.partial(jax.jit, static_argnames=("out_hw", "use_bf16"))
def classifier_net_forward(x, weight_t, bias, *, out_hw=(4, 8), use_bf16=True):
    """x: (B, C, H, W) f32 (NCHW, as in PyTorch)
    weight_t: (C*OH*OW, output_dim) = torch Linear.weight.T
    bias: (output_dim,)
    returns logits (B, output_dim) f32.
    """
    B, C, H, W = x.shape
    OH, OW = out_hw
    assert H % OH == 0 and W % OW == 0, (
        "non-divisible adaptive-pool bins not supported")
    kh, kw = H // OH, W // OW
    P = kh * kw
    F = C * OH * OW                                   # Linear input_dim
    out_dim = weight_t.shape[1]
    assert weight_t.shape == (F, out_dim)
    assert bias.shape == (out_dim,)

    # --- batch tiling: pad B only to a multiple of 8; >=2 tiles when possible
    B8 = _round_up(B, 8)
    nb = max(_cdiv(B8, 256), 2 if B8 > 8 else 1)      # >=2 tiles -> both v7x TCs
    TB = _round_up(_cdiv(B8, nb), 8)
    while TB > 8 and 2 * P * TB * F * 4 > (12 << 20):  # keep x tiles VMEM-modest
        nb += 1
        TB = _round_up(_cdiv(B8, nb), 8)
    B_pad = TB * nb                                    # <= B8 + 8*(nb-1)

    O_pad = _round_up(out_dim, 128)                    # lane-dense output stores

    # --- rearrange x into pooling-tap slabs (single fused XLA copy under jit)
    # x[b, c, oh*kh+i, ow*kw+j]  ->  x_r[i*kw+j, b, (c*OH+oh)*OW+ow]
    x_r = x.astype(jnp.float32).reshape(B, C, OH, kh, OW, kw)
    x_r = x_r.transpose(3, 5, 0, 1, 2, 4).reshape(P, B, F)
    x_r = jnp.pad(x_r, ((0, 0), (0, B_pad - B), (0, 0)))

    w_dtype = jnp.bfloat16 if use_bf16 else jnp.float32
    w_pad = jnp.pad(weight_t.astype(w_dtype), ((0, 0), (0, O_pad - out_dim)))
    b_pad = jnp.pad(bias.astype(jnp.float32),
                    (0, O_pad - out_dim)).reshape(1, O_pad)

    # --- VMEM budget: Pallas double-buffers every block (even the
    #     constant-index weight/bias), so count 2x; stay under v7x headroom.
    wb = 2 if use_bf16 else 4
    vmem_need = 2 * (P * TB * F * 4          # x tap slabs
                     + F * O_pad * wb        # weight
                     + O_pad * 4             # bias
                     + TB * O_pad * 4)       # output tile
    vmem_limit = int(min(max(vmem_need + (4 << 20), 8 << 20), 40 << 20))

    kernel = functools.partial(_pool_linear_kernel, inv_pool=1.0 / P)

    out = pl.pallas_call(
        kernel,
        out_shape=jax.ShapeDtypeStruct((B_pad, O_pad), jnp.float32),
        grid_spec=pltpu.PrefetchScalarGridSpec(
            num_scalar_prefetch=0,
            grid=(nb,),
            in_specs=[
                pl.BlockSpec((P, TB, F), lambda i: (0, i, 0)),   # batch tile of taps
                pl.BlockSpec((F, O_pad), lambda i: (0, 0)),      # weight (resident)
                pl.BlockSpec((1, O_pad), lambda i: (0, 0)),      # bias (resident)
            ],
            out_specs=pl.BlockSpec((TB, O_pad), lambda i: (i, 0)),
        ),
        compiler_params=pltpu.CompilerParams(
            dimension_semantics=("parallel",),
            vmem_limit_bytes=vmem_limit,
        ),
    )(x_r, w_pad, b_pad)

    return out[:B, :out_dim]


def _reference(x, weight_t, bias, out_hw=(4, 8)):
    """Pure-JAX f32 reference: avg-pool -> flatten -> linear (PyTorch semantics)."""
    b, c, h, w = x.shape
    oh, ow = out_hw
    pooled = x.reshape(b, c, oh, h // oh, ow, w // ow).mean(axis=(3, 5))
    feat = pooled.reshape(b, c * oh * ow)
    return feat @ weight_t + bias[None, :]


if __name__ == "__main__":
    # feature_type = 'nn_conv1_maxpool_np'  ->  AdaptiveAvgPool2d((4, 8))
    B, C, H, W = 2, 4, 16, 16
    OH, OW = 4, 8
    input_dim = C * OH * OW          # 128
    output_dim = 10

    key = jax.random.PRNGKey(0)
    kx, kw_, kb = jax.random.split(key, 3)

    x = jax.random.normal(kx, (B, C, H, W), dtype=jnp.float32)
    # torch Linear weight layout is [out, in]; we store it pre-transposed.
    weight_t = (jax.random.normal(kw_, (input_dim, output_dim), dtype=jnp.float32)
                * (1.0 / jnp.sqrt(jnp.float32(input_dim))))
    bias = jax.random.normal(kb, (output_dim,), dtype=jnp.float32) * 0.01

    out = classifier_net_forward(x, weight_t, bias, out_hw=(OH, OW))
    out = jax.block_until_ready(out)

    ref = _reference(x, weight_t, bias, out_hw=(OH, OW))
    assert out.shape == (B, output_dim)
    # bf16 MXU operands (f32 accumulation) -> slightly looser tolerance.
    assert jnp.allclose(out, ref, atol=2e-2, rtol=2e-2), "mismatch vs reference"

    print("KERNEL_OK")
</pallas_src>

<mosaic_0001>
module attributes {stable_mosaic.version = 11 : i64} {
  func.func @_pool_linear_kernel(%arg0: i32, %arg1: memref<8x8x128xf32, #tpu.memory_space<vmem>>, %arg2: memref<128x128xbf16, #tpu.memory_space<vmem>>, %arg3: memref<1x128xf32, #tpu.memory_space<vmem>>, %arg4: memref<8x128xf32, #tpu.memory_space<vmem>>) attributes {dimension_semantics = [#tpu.dimension_semantics<parallel>], iteration_bounds = array<i64: 1>, scalar_prefetch = 0 : i64, scratch_operands = 0 : i64, tpu.core_type = #tpu.core_type<tc>, window_params = [{transform_indices = @transform_0, window_bounds = array<i64: 8, 8, 128>}, {pipeline_mode = #tpu.pipeline_mode<synchronous>, transform_indices = @transform_1, window_bounds = array<i64: 128, 128>}, {pipeline_mode = #tpu.pipeline_mode<synchronous>, transform_indices = @transform_2, window_bounds = array<i64: 1, 128>}, {transform_indices = @transform_3, window_bounds = array<i64: 8, 128>}]} {
    %c0 = arith.constant 0 : index
    %c0_0 = arith.constant 0 : index
    %c0_1 = arith.constant 0 : index
    %0 = vector.load %arg1[%c0, %c0_0, %c0_1] : memref<8x8x128xf32, #tpu.memory_space<vmem>>, vector<8x8x128xf32>
    %cst = arith.constant dense<0.000000e+00> : vector<8x128xf32>
    %1 = vector.multi_reduction <add>, %0, %cst [0] : vector<8x8x128xf32> to vector<8x128xf32>
    %cst_2 = arith.constant 1.250000e-01 : f32
    %2 = vector.broadcast %cst_2 : f32 to vector<8x128xf32>
    %3 = arith.mulf %1, %2 : vector<8x128xf32>
    %4 = arith.truncf %3 : vector<8x128xf32> to vector<8x128xbf16>
    %c0_3 = arith.constant 0 : index
    %c0_4 = arith.constant 0 : index
    %5 = vector.load %arg2[%c0_3, %c0_4] : memref<128x128xbf16, #tpu.memory_space<vmem>>, vector<128x128xbf16>
    %cst_5 = arith.constant dense<0.000000e+00> : vector<8x128xf32>
    %6 = tpu.matmul %4, %5, %cst_5 {dimension_numbers = #tpu.dot_dimension_numbers<[1], [0], [0], [1], [0, 0, 1, 1], [], []>} : vector<8x128xbf16>, vector<128x128xbf16>, vector<8x128xf32> -> vector<8x128xf32>
    %c0_6 = arith.constant 0 : index
    %c0_7 = arith.constant 0 : index
    %7 = vector.load %arg3[%c0_6, %c0_7] : memref<1x128xf32, #tpu.memory_space<vmem>>, vector<1x128xf32>
    %8 = vector.broadcast %7 : vector<1x128xf32> to vector<8x128xf32>
    %9 = arith.addf %6, %8 : vector<8x128xf32>
    %c0_8 = arith.constant 0 : index
    %c0_9 = arith.constant 0 : index
    %10 = vector.load %arg4[%c0_8, %c0_9] : memref<8x128xf32, #tpu.memory_space<vmem>>, vector<8x128xf32>
    tpu.vector_store %arg4[%c0_8, %c0_9], %9 {strides = array<i32>} : memref<8x128xf32, #tpu.memory_space<vmem>>, vector<8x128xf32>,
    return
  }
  func.func @transform_0(%arg0: i32) -> (i32, i32, i32) {
    %c0_i32 = arith.constant 0 : i32
    %c0_i32_0 = arith.constant 0 : i32
    %c0_i32_1 = arith.constant 0 : i32
    return %c0_i32, %arg0, %c0_i32_0 : i32, i32, i32
  }
  func.func @transform_1(%arg0: i32) -> (i32, i32) {
    %c0_i32 = arith.constant 0 : i32
    %c0_i32_0 = arith.constant 0 : i32
    %c0_i32_1 = arith.constant 0 : i32
    return %c0_i32, %c0_i32_0 : i32, i32
  }
  func.func @transform_2(%arg0: i32) -> (i32, i32) {
    %c0_i32 = arith.constant 0 : i32
    %c0_i32_0 = arith.constant 0 : i32
    %c0_i32_1 = arith.constant 0 : i32
    return %c0_i32, %c0_i32_0 : i32, i32
  }
  func.func @transform_3(%arg0: i32) -> (i32, i32) {
    %c0_i32 = arith.constant 0 : i32
    %c0_i32_0 = arith.constant 0 : i32
    return %arg0, %c0_i32 : i32, i32
  }
}

</mosaic_0001>

<llo_original>
// kernel: classifier_net_forward.1
$region0: #{classifier_net_forward.1}
  #allocation0 [shape = 'u32[]', space=smem, size = 0x4, offset = 0x4, fixed_abs, tag = 'smem constant byte address 0x4 - core index']
  #allocation1 [shape = 'u32[72,128]{1,0:T(1,128)}', space=vmem, size = 0x9000, scoped, tag = 'internal scratch']
  %s0 = inlined_call_operand.vmem [shape: f32[8,8,128], index: 0, kind: input, shape index: {}]
  %s1 = inlined_call_operand.vmem [shape: bf16[128,128], index: 1, kind: input, shape index: {}]
  %s2 = inlined_call_operand.vmem [shape: f32[1,128], index: 2, kind: input, shape index: {}]
  %s3 = inlined_call_operand.vmem [shape: f32[8,128], index: 3, kind: output, shape index: {}]
  %s4 = sld [smem:[#allocation0]]
  $region22: #{classifier_net_forward.1} parent=0
    _
  %s6 = ssub.s32 1, %s4
  %s7 = scalar_select 0, %s6, %s4
  // Predicated region
  $region2: #{classifier_net_forward.1} parent=0 // pred_check
    _
  $region3: #{classifier_net_forward.1} parent=0 // pred_check_branch
    %9 = sbr.rel (0) target = $region5
  $region4: #{classifier_net_forward.1} parent=0 // pred_region
    _
  $region5: #{classifier_net_forward.1} parent=0 // pred_fallthru
    _
  // Predicated region
  $region6: #{classifier_net_forward.1} parent=0 // pred_check
    _
  $region7: #{classifier_net_forward.1} parent=0 // pred_check_branch
    %11 = sbr.rel (0) target = $region9
  $region8: #{classifier_net_forward.1} parent=0 // pred_region
    _
  $region9: #{classifier_net_forward.1} parent=0 // pred_fallthru
    _
  // Predicated region
  $region10: #{classifier_net_forward.1} parent=0 // pred_check
    _
  $region11: #{classifier_net_forward.1} parent=0 // pred_check_branch
    %13 = sbr.rel (0) target = $region13
  $region12: #{classifier_net_forward.1} parent=0 // pred_region
    _
  $region13: #{classifier_net_forward.1} parent=0 // pred_fallthru
    _
  %v14 = vld [vmem:[%s0] sm:$0xff]
  %v15 = vld [vmem:[%s0 + $0x8] sm:$0xff]
  %v16 = vld [vmem:[%s0 + $0x10] sm:$0xff]
  %v17 = vld [vmem:[%s0 + $0x18] sm:$0xff]
  %v18 = vld [vmem:[%s0 + $0x20] sm:$0xff]
  %v19 = vld [vmem:[%s0 + $0x28] sm:$0xff]
  %v20 = vld [vmem:[%s0 + $0x30] sm:$0xff]
  %v21 = vld [vmem:[%s0 + $0x38] sm:$0xff]
  %v22 = vadd.f32 %v14, %v15
  %v23 = vadd.f32 %v22, %v16
  %v24 = vadd.f32 %v23, %v17
  %v25 = vadd.f32 %v24, %v18
  %v26 = vadd.f32 %v25, %v19
  %v27 = vadd.f32 %v26, %v20
  %v28 = vadd.f32 %v27, %v21
  %v29 = vmul.f32 %v28, 0.125
  %v30 = vpack.c.bf16 %v29, %v29
  %v31 = vld [vmem:[%s1] sm:$0xf]
  %v32 = vld [vmem:[%s1 + $0x4] sm:$0xf]
  %v33 = vld [vmem:[%s1 + $0x8] sm:$0xf]
  %v34 = vld [vmem:[%s1 + $0xc] sm:$0xf]
  %v35 = vld [vmem:[%s1 + $0x10] sm:$0xf]
  %v36 = vld [vmem:[%s1 + $0x14] sm:$0xf]
  %v37 = vld [vmem:[%s1 + $0x18] sm:$0xf]
  %v38 = vld [vmem:[%s1 + $0x1c] sm:$0xf]
  %v39 = vld [vmem:[%s1 + $0x20] sm:$0xf]
  %v40 = vld [vmem:[%s1 + $0x24] sm:$0xf]
  %v41 = vld [vmem:[%s1 + $0x28] sm:$0xf]
  %v42 = vld [vmem:[%s1 + $0x2c] sm:$0xf]
  %v43 = vld [vmem:[%s1 + $0x30] sm:$0xf]
  %v44 = vld [vmem:[%s1 + $0x34] sm:$0xf]
  %v45 = vld [vmem:[%s1 + $0x38] sm:$0xf]
  %v46 = vld [vmem:[%s1 + $0x3c] sm:$0xf]
  %v47 = vld [vmem:[%s2] sm:$0x1]
  %v49 = vperm.slane %v47, 0
  %v67 = vunpack.c.l.b16 %v31
  %v68 = vunpack.c.l.b16 %v32
  %v69 = vunpack.c.l.b16 %v33
  %v70 = vunpack.c.l.b16 %v34
  %v71 = vunpack.c.l.b16 %v35
  %v72 = vunpack.c.l.b16 %v36
  %v73 = vunpack.c.l.b16 %v37
  %v74 = vunpack.c.l.b16 %v38
  %v75 = vunpack.c.l.b16 %v39
  %v76 = vunpack.c.l.b16 %v40
  %v77 = vunpack.c.l.b16 %v41
  %v78 = vunpack.c.l.b16 %v42
  %v79 = vunpack.c.l.b16 %v43
  %v80 = vunpack.c.l.b16 %v44
  %v81 = vunpack.c.l.b16 %v45
  %v82 = vunpack.c.l.b16 %v46
  %v83 = vpack.c.b16 %v68, %v67
  %v84 = vpack.c.b16 %v70, %v69
  %v85 = vpack.c.b16 %v72, %v71
  %v86 = vpack.c.b16 %v74, %v73
  %v87 = vpack.c.b16 %v76, %v75
  %v88 = vpack.c.b16 %v78, %v77
  %v89 = vpack.c.b16 %v80, %v79
  %v90 = vpack.c.b16 %v82, %v81
  %99 = vmatpush.bf16.msra.mxu0 %v90
  %100 = vmatpush.bf16.msra.mxu0 %v89
  %101 = vmatpush.bf16.msra.mxu0 %v88
  %102 = vmatpush.bf16.msra.mxu0 %v87
  %103 = vmatpush.bf16.msra.mxu0 %v86
  %104 = vmatpush.bf16.msra.mxu0 %v85
  %105 = vmatpush.bf16.msra.mxu0 %v84
  %106 = vmatpush.bf16.msra.mxu0 %v83
  %107 = vmatmul.bf16.gmra.mxu0 %v30
  %v108 = vpop.f32.mrf.mxu0
  %v109 = vadd.f32 %v49, %v108
  %v110 = vpop.f32.mrf.mxu0
  %111 = vdwg.mxu0
  %112 = vst [vmem:[%s3] sm:$0xff] %v109
  // Predicated region
  $region14: #{classifier_net_forward.1} parent=0 // pred_check
    _
  $region15: #{classifier_net_forward.1} parent=0 // pred_check_branch
    %114 = sbr.rel (0) target = $region17
  $region16: #{classifier_net_forward.1} parent=0 // pred_region
    _
  $region17: #{classifier_net_forward.1} parent=0 // pred_fallthru
    _
  // Predicated region
  $region18: #{classifier_net_forward.1} parent=0 // pred_check
    _
  $region19: #{classifier_net_forward.1} parent=0 // pred_check_branch
    %116 = sbr.rel (0) target = $region21
  $region20: #{classifier_net_forward.1} parent=0 // pred_region
    _
  $region21: #{classifier_net_forward.1} parent=0 // pred_fallthru
    _

</llo_original>
